<compile_context>
chip_gen: v7x
topology: tpu7x:2x2x1
jax: 0.10.0
libtpu: 0.0.40
codegen_flags: <defaults>
</compile_context>

<pallas_src>
import jax
import jax.numpy as jnp
from jax import lax
from jax.experimental import pallas as pl
from jax.experimental.pallas import tpu as pltpu

# Conservative across generations: equals v5e's scoped-VMEM default and is
# well under v7x's 32 MiB scoped / 64 MiB physical VMEM.
_VMEM_BUDGET_BYTES = 16 * 1024 * 1024


def meta_learning_kernel(
    x_ref,                # input block                   [tile, in]   (f32 in HBM)
    w1_ref, b1_ref,       # feature_extractor layer 0     [in, H],       [1, H]
    w2_ref, b2_ref,       # feature_extractor layer 3     [H, H/2],      [1, H/2]
    wh1_ref, bh1_ref,     # fused head layer 0            [H/2, 2*H/4],  [1, 2*H/4]
    wh2_ref, bh2_ref,     # fused head layer 1 (blk-diag) [2*H/4, 2*A],  [1, 2*A]
    out_ref,              # combined softmax output       [tile, 2*A]
):
    cdt = w1_ref.dtype            # MXU-input dtype (bf16 default); accumulate f32
    x = x_ref[...].astype(cdt)    # cast in-kernel: no extra HBM pass over x

    # ---- feature extractor (Dropout = identity in eval mode) ----
    h1 = jnp.dot(x, w1_ref[...], preferred_element_type=jnp.float32) + b1_ref[...]
    h1 = jnp.maximum(h1, 0.0)
    feat = jnp.dot(h1.astype(cdt), w2_ref[...],
                   preferred_element_type=jnp.float32) + b2_ref[...]
    feat = jnp.maximum(feat, 0.0)

    # ---- fused heads: one wide matmul per layer instead of two tiny ones ----
    hh = jnp.dot(feat.astype(cdt), wh1_ref[...],
                 preferred_element_type=jnp.float32) + bh1_ref[...]
    hh = jnp.maximum(hh, 0.0)
    logits = jnp.dot(hh.astype(cdt), wh2_ref[...],
                     preferred_element_type=jnp.float32) + bh2_ref[...]

    # ---- masked two-segment softmax over the lane-contiguous [tile, 2A] ----
    # First A lanes = agent logits, last A lanes = resource logits (the second
    # head layer is block-diagonal, so there are no cross terms).  No slices,
    # no concat: per-segment max/sum via lane masks, one exp, one exact divide,
    # one unsliced store.
    num_agents = out_ref.shape[-1] // 2
    lane = lax.broadcasted_iota(jnp.int32, logits.shape, 1)
    is_agent = lane < num_agents

    m_a = jnp.max(jnp.where(is_agent, logits, -jnp.inf), axis=-1, keepdims=True)
    m_r = jnp.max(jnp.where(is_agent, -jnp.inf, logits), axis=-1, keepdims=True)
    m = jnp.where(is_agent, m_a, m_r)
    e = jnp.exp(logits - m)
    s_a = jnp.sum(jnp.where(is_agent, e, 0.0), axis=-1, keepdims=True)
    s_r = jnp.sum(jnp.where(is_agent, 0.0, e), axis=-1, keepdims=True)
    s = jnp.where(is_agent, s_a, s_r)

    out_ref[...] = (e / s).astype(out_ref.dtype)


def fuse_params(params, compute_dtype=jnp.bfloat16):
    """Fuse the two head paths into shared wider matmuls (done ONCE, wrapper-side).

    Weights (MXU inputs) are cast to `compute_dtype` (bf16 by default, f32 for
    exact parity); biases stay f32 because post-matmul elementwise math is kept
    in f32 on all generations."""
    num_agents = params["wa2"].shape[1]
    h4 = params["wa1"].shape[1]

    wh1 = jnp.concatenate([params["wa1"], params["wr1"]], axis=1)   # (H/2, 2*H/4)
    bh1 = jnp.concatenate([params["ba1"], params["br1"]], axis=1)   # (1,   2*H/4)
    wh2 = jnp.zeros((2 * h4, 2 * num_agents), jnp.float32)
    wh2 = wh2.at[:h4, :num_agents].set(params["wa2"])               # block-diagonal:
    wh2 = wh2.at[h4:, num_agents:].set(params["wr2"])               # no cross terms
    bh2 = jnp.concatenate([params["ba2"], params["br2"]], axis=1)   # (1, 2*A)

    cdt = compute_dtype
    return dict(
        w1=params["w1"].astype(cdt), b1=params["b1"].astype(jnp.float32),
        w2=params["w2"].astype(cdt), b2=params["b2"].astype(jnp.float32),
        wh1=wh1.astype(cdt),         bh1=bh1.astype(jnp.float32),
        wh2=wh2.astype(cdt),         bh2=bh2.astype(jnp.float32),
    )


def _pick_batch_tile(batch, max_tile=2048):
    """Default batch tile.

    * B <= 512: one full-batch step (kernel is overhead-dominated anyway).
    * B  > 512: largest sublane-aligned (multiple-of-8) divisor of B that is
      <= min(max_tile, B // 2), so the grid has >= 2 steps — restoring
      DMA/compute pipelining and letting ("parallel",) shard the batch across
      v7x's two TensorCores — while keeping per-step work well above the
      ~0.35us grid-step overhead and the VMEM footprint tiny on every
      generation (v5e 16 MiB scoped default, v7x 64 MiB physical)."""
    if batch <= 512:
        return batch
    target = min(max_tile, batch // 2)
    for tile in range(target, 7, -1):
        if batch % tile == 0 and tile % 8 == 0:
            return tile
    return batch  # no aligned divisor; fall back to a single full-batch step


def _vmem_estimate_bytes(batch_tile, input_dim, two_a, fused):
    """Analytic per-step VMEM estimate: double-buffered x/out blocks and
    weights (constant index_map still reserves two buffers) plus f32
    intermediate activations."""
    hidden = fused["w1"].shape[1]
    h2 = fused["w2"].shape[1]
    hcat = fused["wh1"].shape[1]
    x_blk = batch_tile * input_dim * 4          # x stays f32 in HBM
    out_blk = batch_tile * two_a * 4
    w_bytes = sum(int(w.size) * w.dtype.itemsize for w in fused.values())
    act = batch_tile * (hidden + h2 + hcat + two_a) * 4
    return 2 * (x_blk + out_blk + w_bytes) + act


def meta_learning_forward(x, fused, *, batch_tile=None):
    """x: [B, input_dim] float32.  fused: output of fuse_params.
    Returns (agent_weights, resource_weights), both [B, num_agents] float32."""
    batch, input_dim = x.shape
    two_a = fused["wh2"].shape[1]
    num_agents = two_a // 2

    if batch_tile is None:
        batch_tile = _pick_batch_tile(batch)
    if batch % batch_tile != 0:
        raise ValueError(f"batch ({batch}) must be a multiple of batch_tile "
                         f"({batch_tile}); pad the batch wrapper-side.")
    if batch_tile != batch and batch_tile % 8 != 0:
        raise ValueError("batch_tile must be a multiple of 8 (sublane tiling) "
                         "unless it equals the full batch.")

    est = _vmem_estimate_bytes(batch_tile, input_dim, two_a, fused)
    if est > _VMEM_BUDGET_BYTES:
        raise ValueError(
            f"batch_tile={batch_tile} needs ~{est >> 20} MiB VMEM which exceeds "
            f"the conservative {_VMEM_BUDGET_BYTES >> 20} MiB budget (v5e scoped "
            f"default / v7x headroom); use a smaller batch_tile.")

    weight_order = ["w1", "b1", "w2", "b2", "wh1", "bh1", "wh2", "bh2"]
    weight_args = [fused[k] for k in weight_order]

    x_map = lambda i: (i, 0)
    w_map = lambda i: (0, 0)   # constant -> DMA'd once across the grid

    in_specs = [pl.BlockSpec((batch_tile, input_dim), x_map)]
    in_specs += [pl.BlockSpec(w.shape, w_map) for w in weight_args]

    out_specs = pl.BlockSpec((batch_tile, two_a), x_map)
    out_shape = jax.ShapeDtypeStruct((batch, two_a), jnp.float32)

    fn = pl.pallas_call(
        meta_learning_kernel,
        out_shape=out_shape,
        grid_spec=pltpu.PrefetchScalarGridSpec(
            num_scalar_prefetch=0,
            grid=(batch // batch_tile,),
            in_specs=in_specs,
            out_specs=out_specs,
        ),
        compiler_params=pltpu.CompilerParams(
            dimension_semantics=("parallel",),
            vmem_limit_bytes=_VMEM_BUDGET_BYTES,
        ),
    )
    # x is NOT cast wrapper-side: the kernel casts to the MXU-input dtype
    # in VMEM, avoiding a separate HBM read+write astype pass.
    combined = fn(x, *weight_args)
    # Lane-dense combined output is split wrapper-side.
    return combined[:, :num_agents], combined[:, num_agents:]


def init_params(key, input_dim, hidden_dim, num_agents):
    """Deterministic parameter init mirroring torch.nn.Linear's
    U(-1/sqrt(fan_in), 1/sqrt(fan_in)) for both weights and biases.
    Weights stored as [in, out] (pre-transposed vs torch's [out, in]);
    biases stored as [1, out]."""
    h2 = hidden_dim // 2
    h4 = hidden_dim // 4

    shapes = {
        "w1": (input_dim, hidden_dim), "b1": (1, hidden_dim),
        "w2": (hidden_dim, h2),        "b2": (1, h2),
        "wa1": (h2, h4),               "ba1": (1, h4),
        "wa2": (h4, num_agents),       "ba2": (1, num_agents),
        "wr1": (h2, h4),               "br1": (1, h4),
        "wr2": (h4, num_agents),       "br2": (1, num_agents),
    }
    fan_in = {
        "w1": input_dim, "b1": input_dim,
        "w2": hidden_dim, "b2": hidden_dim,
        "wa1": h2, "ba1": h2, "wa2": h4, "ba2": h4,
        "wr1": h2, "br1": h2, "wr2": h4, "br2": h4,
    }
    params = {}
    keys = jax.random.split(key, len(shapes))
    for k_rng, (name, shp) in zip(keys, sorted(shapes.items())):
        bound = 1.0 / float(fan_in[name]) ** 0.5
        params[name] = jax.random.uniform(
            k_rng, shp, dtype=jnp.float32, minval=-bound, maxval=bound
        )
    return params


def reference_forward(x, p):
    """Pure-JAX reference replicating the PyTorch forward (eval mode)."""
    h1 = jnp.maximum(x @ p["w1"] + p["b1"], 0.0)
    feat = jnp.maximum(h1 @ p["w2"] + p["b2"], 0.0)
    a1 = jnp.maximum(feat @ p["wa1"] + p["ba1"], 0.0)
    aw = jax.nn.softmax(a1 @ p["wa2"] + p["ba2"], axis=-1)
    r1 = jnp.maximum(feat @ p["wr1"] + p["br1"], 0.0)
    rw = jax.nn.softmax(r1 @ p["wr2"] + p["br2"], axis=-1)
    return aw, rw


if __name__ == "__main__":
    # TODO(synk): nn.Dropout(0.2) is implemented as identity (eval()/inference
    # semantics); training-mode dropout masks are not generated in-kernel.
    input_dim = 32
    hidden_dim = 32     # -> hidden//2 = 16, hidden//4 = 8
    num_agents = 6
    batch = 16

    key = jax.random.PRNGKey(0)
    k_x, k_p, k_big = jax.random.split(key, 3)
    x = jax.random.normal(k_x, (batch, input_dim), dtype=jnp.float32)
    params = init_params(k_p, input_dim, hidden_dim, num_agents)
    ref_a, ref_r = reference_forward(x, params)

    # ---- default bf16 MXU-input path (f32 accumulation, exact softmax) ----
    fused_bf16 = fuse_params(params)                       # bf16 default
    agent_bw, resource_bw = meta_learning_forward(x, fused_bf16)
    jax.block_until_ready((agent_bw, resource_bw))
    assert jnp.allclose(agent_bw, ref_a, atol=3e-2, rtol=3e-2)
    assert jnp.allclose(resource_bw, ref_r, atol=3e-2, rtol=3e-2)
    assert jnp.allclose(jnp.sum(agent_bw, axis=-1), 1.0, atol=1e-5)
    assert jnp.allclose(jnp.sum(resource_bw, axis=-1), 1.0, atol=1e-5)

    # ---- f32 path: exact parity with the PyTorch-equivalent reference ----
    fused_f32 = fuse_params(params, jnp.float32)
    agent_w, resource_w = meta_learning_forward(x, fused_f32)
    jax.block_until_ready((agent_w, resource_w))
    assert jnp.allclose(agent_w, ref_a, atol=1e-4, rtol=1e-4)
    assert jnp.allclose(resource_w, ref_r, atol=1e-4, rtol=1e-4)
    assert jnp.allclose(jnp.sum(agent_w, axis=-1), 1.0, atol=1e-5)
    assert jnp.allclose(jnp.sum(resource_w, axis=-1), 1.0, atol=1e-5)

    # ---- larger batch: default tile picker -> multi-step, even-length grid ----
    big_batch = 1024
    xb = jax.random.normal(k_big, (big_batch, input_dim), dtype=jnp.float32)
    refb_a, refb_r = reference_forward(xb, params)
    assert _pick_batch_tile(big_batch) == 512          # grid=(2,): both v7x TCs busy
    agent_big, resource_big = meta_learning_forward(xb, fused_bf16)
    jax.block_until_ready((agent_big, resource_big))
    assert jnp.allclose(agent_big, refb_a, atol=3e-2, rtol=3e-2)
    assert jnp.allclose(resource_big, refb_r, atol=3e-2, rtol=3e-2)

    print("KERNEL_OK")
</pallas_src>

<mosaic_0001>
module attributes {stable_mosaic.version = 11 : i64} {
  func.func @meta_learning_kernel(%arg0: i32, %arg1: memref<16x32xf32, #tpu.memory_space<vmem>>, %arg2: memref<32x32xbf16, #tpu.memory_space<vmem>>, %arg3: memref<1x32xf32, #tpu.memory_space<vmem>>, %arg4: memref<32x16xbf16, #tpu.memory_space<vmem>>, %arg5: memref<1x16xf32, #tpu.memory_space<vmem>>, %arg6: memref<16x16xbf16, #tpu.memory_space<vmem>>, %arg7: memref<1x16xf32, #tpu.memory_space<vmem>>, %arg8: memref<16x12xbf16, #tpu.memory_space<vmem>>, %arg9: memref<1x12xf32, #tpu.memory_space<vmem>>, %arg10: memref<16x12xf32, #tpu.memory_space<vmem>>) attributes {dimension_semantics = [#tpu.dimension_semantics<parallel>], iteration_bounds = array<i64: 1>, scalar_prefetch = 0 : i64, scratch_operands = 0 : i64, tpu.core_type = #tpu.core_type<tc>, window_params = [{transform_indices = @transform_0, window_bounds = array<i64: 16, 32>}, {pipeline_mode = #tpu.pipeline_mode<synchronous>, transform_indices = @transform_1, window_bounds = array<i64: 32, 32>}, {pipeline_mode = #tpu.pipeline_mode<synchronous>, transform_indices = @transform_2, window_bounds = array<i64: 1, 32>}, {pipeline_mode = #tpu.pipeline_mode<synchronous>, transform_indices = @transform_3, window_bounds = array<i64: 32, 16>}, {pipeline_mode = #tpu.pipeline_mode<synchronous>, transform_indices = @transform_4, window_bounds = array<i64: 1, 16>}, {pipeline_mode = #tpu.pipeline_mode<synchronous>, transform_indices = @transform_5, window_bounds = array<i64: 16, 16>}, {pipeline_mode = #tpu.pipeline_mode<synchronous>, transform_indices = @transform_6, window_bounds = array<i64: 1, 16>}, {pipeline_mode = #tpu.pipeline_mode<synchronous>, transform_indices = @transform_7, window_bounds = array<i64: 16, 12>}, {pipeline_mode = #tpu.pipeline_mode<synchronous>, transform_indices = @transform_8, window_bounds = array<i64: 1, 12>}, {transform_indices = @transform_9, window_bounds = array<i64: 16, 12>}]} {
    %c0 = arith.constant 0 : index
    %c0_0 = arith.constant 0 : index
    %0 = vector.load %arg1[%c0, %c0_0] : memref<16x32xf32, #tpu.memory_space<vmem>>, vector<16x32xf32>
    %1 = arith.truncf %0 : vector<16x32xf32> to vector<16x32xbf16>
    %c0_1 = arith.constant 0 : index
    %c0_2 = arith.constant 0 : index
    %2 = vector.load %arg2[%c0_1, %c0_2] : memref<32x32xbf16, #tpu.memory_space<vmem>>, vector<32x32xbf16>
    %cst = arith.constant dense<0.000000e+00> : vector<16x32xf32>
    %3 = tpu.matmul %1, %2, %cst {dimension_numbers = #tpu.dot_dimension_numbers<[1], [0], [0], [1], [0, 0, 1, 1], [], []>} : vector<16x32xbf16>, vector<32x32xbf16>, vector<16x32xf32> -> vector<16x32xf32>
    %c0_3 = arith.constant 0 : index
    %c0_4 = arith.constant 0 : index
    %4 = vector.load %arg3[%c0_3, %c0_4] : memref<1x32xf32, #tpu.memory_space<vmem>>, vector<1x32xf32>
    %5 = vector.broadcast %4 : vector<1x32xf32> to vector<16x32xf32>
    %6 = arith.addf %3, %5 : vector<16x32xf32>
    %cst_5 = arith.constant 0.000000e+00 : f32
    %7 = vector.broadcast %cst_5 : f32 to vector<16x32xf32>
    %8 = arith.maximumf %6, %7 : vector<16x32xf32>
    %9 = arith.truncf %8 : vector<16x32xf32> to vector<16x32xbf16>
    %c0_6 = arith.constant 0 : index
    %c0_7 = arith.constant 0 : index
    %10 = vector.load %arg4[%c0_6, %c0_7] : memref<32x16xbf16, #tpu.memory_space<vmem>>, vector<32x16xbf16>
    %cst_8 = arith.constant dense<0.000000e+00> : vector<16x16xf32>
    %11 = tpu.matmul %9, %10, %cst_8 {dimension_numbers = #tpu.dot_dimension_numbers<[1], [0], [0], [1], [0, 0, 1, 1], [], []>} : vector<16x32xbf16>, vector<32x16xbf16>, vector<16x16xf32> -> vector<16x16xf32>
    %c0_9 = arith.constant 0 : index
    %c0_10 = arith.constant 0 : index
    %12 = vector.load %arg5[%c0_9, %c0_10] : memref<1x16xf32, #tpu.memory_space<vmem>>, vector<1x16xf32>
    %13 = vector.broadcast %12 : vector<1x16xf32> to vector<16x16xf32>
    %14 = arith.addf %11, %13 : vector<16x16xf32>
    %cst_11 = arith.constant 0.000000e+00 : f32
    %15 = vector.broadcast %cst_11 : f32 to vector<16x16xf32>
    %16 = arith.maximumf %14, %15 : vector<16x16xf32>
    %17 = arith.truncf %16 : vector<16x16xf32> to vector<16x16xbf16>
    %c0_12 = arith.constant 0 : index
    %c0_13 = arith.constant 0 : index
    %18 = vector.load %arg6[%c0_12, %c0_13] : memref<16x16xbf16, #tpu.memory_space<vmem>>, vector<16x16xbf16>
    %cst_14 = arith.constant dense<0.000000e+00> : vector<16x16xf32>
    %19 = tpu.matmul %17, %18, %cst_14 {dimension_numbers = #tpu.dot_dimension_numbers<[1], [0], [0], [1], [0, 0, 1, 1], [], []>} : vector<16x16xbf16>, vector<16x16xbf16>, vector<16x16xf32> -> vector<16x16xf32>
    %c0_15 = arith.constant 0 : index
    %c0_16 = arith.constant 0 : index
    %20 = vector.load %arg7[%c0_15, %c0_16] : memref<1x16xf32, #tpu.memory_space<vmem>>, vector<1x16xf32>
    %21 = vector.broadcast %20 : vector<1x16xf32> to vector<16x16xf32>
    %22 = arith.addf %19, %21 : vector<16x16xf32>
    %cst_17 = arith.constant 0.000000e+00 : f32
    %23 = vector.broadcast %cst_17 : f32 to vector<16x16xf32>
    %24 = arith.maximumf %22, %23 : vector<16x16xf32>
    %25 = arith.truncf %24 : vector<16x16xf32> to vector<16x16xbf16>
    %c0_18 = arith.constant 0 : index
    %c0_19 = arith.constant 0 : index
    %26 = vector.load %arg8[%c0_18, %c0_19] : memref<16x12xbf16, #tpu.memory_space<vmem>>, vector<16x12xbf16>
    %cst_20 = arith.constant dense<0.000000e+00> : vector<16x12xf32>
    %27 = tpu.matmul %25, %26, %cst_20 {dimension_numbers = #tpu.dot_dimension_numbers<[1], [0], [0], [1], [0, 0, 1, 1], [], []>} : vector<16x16xbf16>, vector<16x12xbf16>, vector<16x12xf32> -> vector<16x12xf32>
    %c0_21 = arith.constant 0 : index
    %c0_22 = arith.constant 0 : index
    %28 = vector.load %arg9[%c0_21, %c0_22] : memref<1x12xf32, #tpu.memory_space<vmem>>, vector<1x12xf32>
    %29 = vector.broadcast %28 : vector<1x12xf32> to vector<16x12xf32>
    %30 = arith.addf %27, %29 : vector<16x12xf32>
    %31 = tpu.iota {dimensions = array<i32: 1>} : vector<16x12xi32>
    %c6_i32 = arith.constant 6 : i32
    %32 = vector.broadcast %c6_i32 : i32 to vector<16x12xi32>
    %33 = arith.cmpi slt, %31, %32 : vector<16x12xi32>
    %cst_23 = arith.constant 0xFF800000 : f32
    %34 = vector.broadcast %cst_23 : f32 to vector<16x12xf32>
    %35 = arith.select %33, %30, %34 : vector<16x12xi1>, vector<16x12xf32>
    %cst_24 = arith.constant dense<0xFF800000> : vector<16xf32>
    %36 = vector.multi_reduction <maximumf>, %35, %cst_24 [1] : vector<16x12xf32> to vector<16xf32>
    %37 = vector.shape_cast %36 : vector<16xf32> to vector<16x1xf32>
    %cst_25 = arith.constant 0xFF800000 : f32
    %38 = vector.broadcast %cst_25 : f32 to vector<16x12xf32>
    %39 = arith.select %33, %38, %30 : vector<16x12xi1>, vector<16x12xf32>
    %cst_26 = arith.constant dense<0xFF800000> : vector<16xf32>
    %40 = vector.multi_reduction <maximumf>, %39, %cst_26 [1] : vector<16x12xf32> to vector<16xf32>
    %41 = vector.shape_cast %40 : vector<16xf32> to vector<16x1xf32>
    %42 = vector.shape_cast %37 : vector<16x1xf32> to vector<16x1xf32>
    %43 = vector.broadcast %42 : vector<16x1xf32> to vector<16x12xf32>
    %44 = vector.shape_cast %41 : vector<16x1xf32> to vector<16x1xf32>
    %45 = vector.broadcast %44 : vector<16x1xf32> to vector<16x12xf32>
    %46 = arith.select %33, %43, %45 : vector<16x12xi1>, vector<16x12xf32>
    %47 = arith.subf %30, %46 : vector<16x12xf32>
    %48 = math.exp %47 : vector<16x12xf32>
    %cst_27 = arith.constant 0.000000e+00 : f32
    %49 = vector.broadcast %cst_27 : f32 to vector<16x12xf32>
    %50 = arith.select %33, %48, %49 : vector<16x12xi1>, vector<16x12xf32>
    %cst_28 = arith.constant dense<0.000000e+00> : vector<16xf32>
    %51 = vector.multi_reduction <add>, %50, %cst_28 [1] : vector<16x12xf32> to vector<16xf32>
    %52 = vector.shape_cast %51 : vector<16xf32> to vector<16x1xf32>
    %cst_29 = arith.constant 0.000000e+00 : f32
    %53 = vector.broadcast %cst_29 : f32 to vector<16x12xf32>
    %54 = arith.select %33, %53, %48 : vector<16x12xi1>, vector<16x12xf32>
    %cst_30 = arith.constant dense<0.000000e+00> : vector<16xf32>
    %55 = vector.multi_reduction <add>, %54, %cst_30 [1] : vector<16x12xf32> to vector<16xf32>
    %56 = vector.shape_cast %55 : vector<16xf32> to vector<16x1xf32>
    %57 = vector.shape_cast %52 : vector<16x1xf32> to vector<16x1xf32>
    %58 = vector.broadcast %57 : vector<16x1xf32> to vector<16x12xf32>
    %59 = vector.shape_cast %56 : vector<16x1xf32> to vector<16x1xf32>
    %60 = vector.broadcast %59 : vector<16x1xf32> to vector<16x12xf32>
    %61 = arith.select %33, %58, %60 : vector<16x12xi1>, vector<16x12xf32>
    %62 = arith.divf %48, %61 : vector<16x12xf32>
    %c0_31 = arith.constant 0 : index
    %c0_32 = arith.constant 0 : index
    %63 = vector.load %arg10[%c0_31, %c0_32] : memref<16x12xf32, #tpu.memory_space<vmem>>, vector<16x12xf32>
    tpu.vector_store %arg10[%c0_31, %c0_32], %62 {strides = array<i32>} : memref<16x12xf32, #tpu.memory_space<vmem>>, vector<16x12xf32>,
    return
  }
  func.func @transform_0(%arg0: i32) -> (i32, i32) {
    %c0_i32 = arith.constant 0 : i32
    %c0_i32_0 = arith.constant 0 : i32
    return %arg0, %c0_i32 : i32, i32
  }
  func.func @transform_1(%arg0: i32) -> (i32, i32) {
    %c0_i32 = arith.constant 0 : i32
    %c0_i32_0 = arith.constant 0 : i32
    %c0_i32_1 = arith.constant 0 : i32
    return %c0_i32, %c0_i32_0 : i32, i32
  }
  func.func @transform_2(%arg0: i32) -> (i32, i32) {
    %c0_i32 = arith.constant 0 : i32
    %c0_i32_0 = arith.constant 0 : i32
    %c0_i32_1 = arith.constant 0 : i32
    return %c0_i32, %c0_i32_0 : i32, i32
  }
  func.func @transform_3(%arg0: i32) -> (i32, i32) {
    %c0_i32 = arith.constant 0 : i32
    %c0_i32_0 = arith.constant 0 : i32
    %c0_i32_1 = arith.constant 0 : i32
    return %c0_i32, %c0_i32_0 : i32, i32
  }
  func.func @transform_4(%arg0: i32) -> (i32, i32) {
    %c0_i32 = arith.constant 0 : i32
    %c0_i32_0 = arith.constant 0 : i32
    %c0_i32_1 = arith.constant 0 : i32
    return %c0_i32, %c0_i32_0 : i32, i32
  }
  func.func @transform_5(%arg0: i32) -> (i32, i32) {
    %c0_i32 = arith.constant 0 : i32
    %c0_i32_0 = arith.constant 0 : i32
    %c0_i32_1 = arith.constant 0 : i32
    return %c0_i32, %c0_i32_0 : i32, i32
  }
  func.func @transform_6(%arg0: i32) -> (i32, i32) {
    %c0_i32 = arith.constant 0 : i32
    %c0_i32_0 = arith.constant 0 : i32
    %c0_i32_1 = arith.constant 0 : i32
    return %c0_i32, %c0_i32_0 : i32, i32
  }
  func.func @transform_7(%arg0: i32) -> (i32, i32) {
    %c0_i32 = arith.constant 0 : i32
    %c0_i32_0 = arith.constant 0 : i32
    %c0_i32_1 = arith.constant 0 : i32
    return %c0_i32, %c0_i32_0 : i32, i32
  }
  func.func @transform_8(%arg0: i32) -> (i32, i32) {
    %c0_i32 = arith.constant 0 : i32
    %c0_i32_0 = arith.constant 0 : i32
    %c0_i32_1 = arith.constant 0 : i32
    return %c0_i32, %c0_i32_0 : i32, i32
  }
  func.func @transform_9(%arg0: i32) -> (i32, i32) {
    %c0_i32 = arith.constant 0 : i32
    %c0_i32_0 = arith.constant 0 : i32
    return %arg0, %c0_i32 : i32, i32
  }
}

</mosaic_0001>

<llo_original>
// kernel: tpu_custom_call.1
$region0: #{tpu_custom_call.1}
  #allocation0 [shape = 'u32[]', space=smem, size = 0x4, offset = 0x4, fixed_abs, tag = 'smem constant byte address 0x4 - core index']
  #allocation1 [shape = 'u32[144,128]{1,0:T(1,128)}', space=vmem, size = 0x12000, scoped, tag = 'internal scratch']
  %s0 = inlined_call_operand.vmem [shape: f32[16,32], index: 0, kind: input, shape index: {}]
  %s1 = inlined_call_operand.hbm [shape: bf16[32,32], index: 1, kind: input, shape index: {}]
  %s2 = inlined_call_operand.vmem [shape: f32[1,32], index: 2, kind: input, shape index: {}]
  %s3 = inlined_call_operand.vmem [shape: bf16[32,16], index: 3, kind: input, shape index: {}]
  %s4 = inlined_call_operand.vmem [shape: f32[1,16], index: 4, kind: input, shape index: {}]
  %s5 = inlined_call_operand.vmem [shape: bf16[16,16], index: 5, kind: input, shape index: {}]
  %s6 = inlined_call_operand.vmem [shape: f32[1,16], index: 6, kind: input, shape index: {}]
  %s7 = inlined_call_operand.vmem [shape: bf16[16,12], index: 7, kind: input, shape index: {}]
  %s8 = inlined_call_operand.vmem [shape: f32[1,12], index: 8, kind: input, shape index: {}]
  %s9 = inlined_call_operand.hbm [shape: f32[16,12], index: 9, kind: output, shape index: {}]
  %s10 = sld [smem:[#allocation0]]
  $region50: #{tpu_custom_call.1} parent=0
    _
  %s12 = ssub.s32 1, %s10
  %s13 = scalar_select 0, %s12, %s10
  $region1: #{tpu_custom_call.1} parent=0
    #allocation2 [shape = 'u8[8192]{0}', space=vmem, size = 0x2000, scoped, tag = 'input window, operand 1, single buffered']
    #allocation3 [shape = 's32[1]{0}', space=sflag, size = 0x4, scoped, tag = 'scoped memory for tpu_custom_call.1']
    #allocation4 [shape = 's32[1]{0}', space=sflag, size = 0x4, scoped, tag = 'scoped memory for tpu_custom_call.1']
    #allocation5 [shape = 'u8[8192]{0}', space=vmem, size = 0x2000, scoped, tag = 'output window, operand 0, single buffered']
    %14 = vsyncpa [#allocation3], 0
    %15 = vsyncpa [#allocation4], 0
    // Predicated region
    $region2: #{tpu_custom_call.1} parent=1 // pred_check
      _
    $region3: #{tpu_custom_call.1} parent=1 // pred_check_branch
      %17 = sbr.rel (0) target = $region5
    $region4: #{tpu_custom_call.1} parent=1 // pred_region
      _
    $region5: #{tpu_custom_call.1} parent=1 // pred_fallthru
      _
    // Predicated region
    $region6: #{tpu_custom_call.1} parent=1 // pred_check
      _
    $region7: #{tpu_custom_call.1} parent=1 // pred_check_branch
      %19 = sbr.rel (0) target = $region9
    $region8: #{tpu_custom_call.1} parent=1 // pred_region
      %s21 = ssub.s32 256, 256
      %22 = vsyncadd [#allocation3], %s21
      %s23 = sshll.u32 [#allocation2], 4
      %s24 = int_to_ptr.vmem [resolvable:$true] %s23
      %29 = dma.hbm_to_vmem [thread:$0]  %s1, 256, %s24, [#allocation3], 64, 64, 4
    $region9: #{tpu_custom_call.1} parent=1 // pred_fallthru
      _
    // Predicated region
    $region10: #{tpu_custom_call.1} parent=1 // pred_check
      _
    $region11: #{tpu_custom_call.1} parent=1 // pred_check_branch
      %31 = sbr.rel (0) target = $region13
    $region12: #{tpu_custom_call.1} parent=1 // pred_region
      _
    $region13: #{tpu_custom_call.1} parent=1 // pred_fallthru
      _
    // Predicated region
    $region14: #{tpu_custom_call.1} parent=1 // pred_check
      _
    $region15: #{tpu_custom_call.1} parent=1 // pred_check_branch
      %33 = sbr.rel (0) target = $region17
    $region16: #{tpu_custom_call.1} parent=1 // pred_region
      _
    $region17: #{tpu_custom_call.1} parent=1 // pred_fallthru
      _
    // Predicated region
    $region18: #{tpu_custom_call.1} parent=1 // pred_check
      _
    $region19: #{tpu_custom_call.1} parent=1 // pred_check_branch
      %35 = sbr.rel (0) target = $region21
    $region20: #{tpu_custom_call.1} parent=1 // pred_region
      _
    $region21: #{tpu_custom_call.1} parent=1 // pred_fallthru
      _
    // Predicated region
    $region22: #{tpu_custom_call.1} parent=1 // pred_check
      _
    $region23: #{tpu_custom_call.1} parent=1 // pred_check_branch
      %37 = sbr.rel (0) target = $region25
    $region24: #{tpu_custom_call.1} parent=1 // pred_region
      _
    $region25: #{tpu_custom_call.1} parent=1 // pred_fallthru
      _
    // Predicated region
    $region26: #{tpu_custom_call.1} parent=1 // pred_check
      _
    $region27: #{tpu_custom_call.1} parent=1 // pred_check_branch
      %39 = sbr.rel (0) target = $region29
    $region28: #{tpu_custom_call.1} parent=1 // pred_region
      _
    $region29: #{tpu_custom_call.1} parent=1 // pred_fallthru
      _
    // Predicated region
    $region30: #{tpu_custom_call.1} parent=1 // pred_check
      _
    $region31: #{tpu_custom_call.1} parent=1 // pred_check_branch
      %41 = sbr.rel (0) target = $region33
    $region32: #{tpu_custom_call.1} parent=1 // pred_region
      _
    $region33: #{tpu_custom_call.1} parent=1 // pred_fallthru
      _
    // Predicated region
    $region34: #{tpu_custom_call.1} parent=1 // pred_check
      _
    $region35: #{tpu_custom_call.1} parent=1 // pred_check_branch
      %43 = sbr.rel (0) target = $region37
    $region36: #{tpu_custom_call.1} parent=1 // pred_region
      _
    $region37: #{tpu_custom_call.1} parent=1 // pred_fallthru
      _
    // Predicated region
    $region38: #{tpu_custom_call.1} parent=1 // pred_check
      _
    $region39: #{tpu_custom_call.1} parent=1 // pred_check_branch
      %45 = sbr.rel (0) target = $region41
    $region40: #{tpu_custom_call.1} parent=1 // pred_region
      %46 = dma.done [#allocation3], 256
    $region41: #{tpu_custom_call.1} parent=1 // pred_fallthru
      _
    %v48 = vld [vmem:[%s0] sm:$0xff]
    %v49 = vld [vmem:[%s0 + $0x8] sm:$0xff]
    %v50 = vpack.c.bf16 %v49, %v48
    %v51 = vld [vmem:[#allocation2] sm:$0xf]
    %v52 = vld [vmem:[#allocation2 + $0x4] sm:$0xf]
    %v53 = vld [vmem:[#allocation2 + $0x8] sm:$0xf]
    %v54 = vld [vmem:[#allocation2 + $0xc] sm:$0xf]
    %v55 = vld [vmem:[%s2] sm:$0x1]
    %v57 = vlaneseq
    %v58 = vshrl.u32 %v57, 7
    %v59 = vsub.s32 0, %v58
    %v60 = vrot.slane %v55, %v59
    %v66 = vunpack.c.l.b16 %v51
    %v67 = vunpack.c.l.b16 %v52
    %v68 = vunpack.c.l.b16 %v53
    %v69 = vunpack.c.l.b16 %v54
    %v70 = vpack.c.b16 %v67, %v66
    %v71 = vpack.c.b16 %v69, %v68
    %vm74 = vcmask 261120
    %v76 = vsel %vm74, %v50, 0
    %78 = vmatprep.subr.bf16.mxu0 0
    %79 = vmatpush1.bf16.msra.mxu0 %v70
    %80 = vmatprep.subr.bf16.mxu0 0
    %81 = vmatpush1.bf16.msra.mxu0 %v71
    %82 = vmatprep.subr.bf16.mxu0 0
    %83 = vmatpush1.bf16.msra.mxu0 0
    %84 = vmatprep.subr.bf16.mxu0 0
    %85 = vmatpush1.bf16.msra.mxu0 0
    %86 = vmatprep.subr.bf16.mxu0 0
    %87 = vmatpush1.bf16.msra.mxu0 0
    %88 = vmatprep.subr.bf16.mxu0 0
    %89 = vmatpush1.bf16.msra.mxu0 0
    %90 = vmatprep.subr.bf16.mxu0 0
    %91 = vmatpush1.bf16.msra.mxu0 0
    %92 = vmatprep.subr.bf16.mxu0 0
    %93 = vmatpush1.bf16.msra.mxu0 0
    %94 = vmatprep.subr.bf16.mxu0 0
    %95 = vmatpush1.bf16.msra.mxu0 0
    %96 = vmatprep.subr.bf16.mxu0 0
    %97 = vmatpush1.bf16.msra.mxu0 0
    %98 = vmatprep.subr.bf16.mxu0 0
    %99 = vmatpush1.bf16.msra.mxu0 0
    %100 = vmatprep.subr.bf16.mxu0 0
    %101 = vmatpush1.bf16.msra.mxu0 0
    %102 = vmatprep.subr.bf16.mxu0 0
    %103 = vmatpush1.bf16.msra.mxu0 0
    %104 = vmatprep.subr.bf16.mxu0 0
    %105 = vmatpush1.bf16.msra.mxu0 0
    %106 = vmatprep.subr.bf16.mxu0 0
    %107 = vmatpush1.bf16.msra.mxu0 0
    %108 = vmatprep.subr.bf16.mxu0 0
    %109 = vmatpush1.bf16.msra.mxu0 0
    %110 = vmatprep.mubr.bf16.mxu0 0
    %111 = vmatmul.mubr.bf16.gmra.mrb[0].mxu0 %v76
    %v112 = vpop.f32.mrb[0].mxu0
    %v113 = vadd.f32 %v60, %v112
    %v114 = vpop.f32.mrb[0].mxu0
    %v115 = vpop.f32.mrb[0].mxu0
    %v116 = vadd.f32 %v60, %v115
    %v117 = vpop.f32.mrb[0].mxu0
    %118 = vdwg.mxu0
    %v119 = vmax.f32 %v113, 0.0
    %v120 = vmax.f32 %v116, 0.0
    %v121 = vpack.c.bf16 %v120, %v119
    %v122 = vld [vmem:[%s3] sm:$0xf]
    %v123 = vld [vmem:[%s3 + $0x4] sm:$0xf]
    %v124 = vld [vmem:[%s3 + $0x8] sm:$0xf]
    %v125 = vld [vmem:[%s3 + $0xc] sm:$0xf]
    %v126 = vld [vmem:[%s4] sm:$0x1]
    %v128 = vlaneseq
    %v129 = vshrl.u32 %v128, 7
    %v130 = vsub.s32 0, %v129
    %v131 = vrot.slane %v126, %v130
    %v137 = vunpack.c.l.b16 %v122
    %v138 = vunpack.c.l.b16 %v123
    %v139 = vunpack.c.l.b16 %v124
    %v140 = vunpack.c.l.b16 %v125
    %v141 = vpack.c.b16 %v138, %v137
    %v142 = vpack.c.b16 %v140, %v139
    %v146 = vsel %vm74, %v121, 0
    %148 = vmatprep.subr.bf16.mxu0 0
    %149 = vmatpush1.bf16.msra.mxu0 %v141
    %150 = vmatprep.subr.bf16.mxu0 0
    %151 = vmatpush1.bf16.msra.mxu0 %v142
    %152 = vmatprep.subr.bf16.mxu0 0
    %153 = vmatpush1.bf16.msra.mxu0 0
    %154 = vmatprep.subr.bf16.mxu0 0
    %155 = vmatpush1.bf16.msra.mxu0 0
    %156 = vmatprep.subr.bf16.mxu0 0
    %157 = vmatpush1.bf16.msra.mxu0 0
    %158 = vmatprep.subr.bf16.mxu0 0
    %159 = vmatpush1.bf16.msra.mxu0 0
    %160 = vmatprep.subr.bf16.mxu0 0
    %161 = vmatpush1.bf16.msra.mxu0 0
    %162 = vmatprep.subr.bf16.mxu0 0
    %163 = vmatpush1.bf16.msra.mxu0 0
    %164 = vmatprep.subr.bf16.mxu0 0
    %165 = vmatpush1.bf16.msra.mxu0 0
    %166 = vmatprep.subr.bf16.mxu0 0
    %167 = vmatpush1.bf16.msra.mxu0 0
    %168 = vmatprep.subr.bf16.mxu0 0
    %169 = vmatpush1.bf16.msra.mxu0 0
    %170 = vmatprep.subr.bf16.mxu0 0
    %171 = vmatpush1.bf16.msra.mxu0 0
    %172 = vmatprep.subr.bf16.mxu0 0
    %173 = vmatpush1.bf16.msra.mxu0 0
    %174 = vmatprep.subr.bf16.mxu0 0
    %175 = vmatpush1.bf16.msra.mxu0 0
    %176 = vmatprep.subr.bf16.mxu0 0
    %177 = vmatpush1.bf16.msra.mxu0 0
    %178 = vmatprep.subr.bf16.mxu0 0
    %179 = vmatpush1.bf16.msra.mxu0 0
    %180 = vmatprep.mubr.bf16.mxu0 0
    %181 = vmatmul.mubr.bf16.gmra.mrb[0].mxu0 %v146
    %v182 = vpop.f32.mrb[0].mxu0
    %v183 = vadd.f32 %v131, %v182
    %v184 = vpop.f32.mrb[0].mxu0
    %v185 = vpop.f32.mrb[0].mxu0
    %v186 = vadd.f32 %v131, %v185
    %v187 = vpop.f32.mrb[0].mxu0
    %188 = vdwg.mxu0
    %v189 = vmax.f32 %v183, 0.0
    %v190 = vmax.f32 %v186, 0.0
    %v191 = vpack.c.bf16 %v190, %v189
    %v192 = vld [vmem:[%s5] sm:$0xf]
    %v193 = vld [vmem:[%s5 + $0x4] sm:$0xf]
    %v194 = vld [vmem:[%s6] sm:$0x1]
    %v196 = vlaneseq
    %v197 = vshrl.u32 %v196, 7
    %v198 = vsub.s32 0, %v197
    %v199 = vrot.slane %v194, %v198
    %v203 = vunpack.c.l.b16 %v192
    %v204 = vunpack.c.l.b16 %v193
    %v205 = vpack.c.b16 %v204, %v203
    %vm207 = vcmask 130048
    %v209 = vsel %vm207, %v191, 0
    %211 = vmatprep.subr.bf16.mxu0 0
    %212 = vmatpush1.bf16.msra.mxu0 %v205
    %213 = vmatprep.subr.bf16.mxu0 0
    %214 = vmatpush1.bf16.msra.mxu0 0
    %215 = vmatprep.subr.bf16.mxu0 0
    %216 = vmatpush1.bf16.msra.mxu0 0
    %217 = vmatprep.subr.bf16.mxu0 0
    %218 = vmatpush1.bf16.msra.mxu0 0
    %219 = vmatprep.subr.bf16.mxu0 0
    %220 = vmatpush1.bf16.msra.mxu0 0
    %221 = vmatprep.subr.bf16.mxu0 0
    %222 = vmatpush1.bf16.msra.mxu0 0
    %223 = vmatprep.subr.bf16.mxu0 0
    %224 = vmatpush1.bf16.msra.mxu0 0
    %225 = vmatprep.subr.bf16.mxu0 0
    %226 = vmatpush1.bf16.msra.mxu0 0
    %227 = vmatprep.subr.bf16.mxu0 0
    %228 = vmatpush1.bf16.msra.mxu0 0
    %229 = vmatprep.subr.bf16.mxu0 0
    %230 = vmatpush1.bf16.msra.mxu0 0
    %231 = vmatprep.subr.bf16.mxu0 0
    %232 = vmatpush1.bf16.msra.mxu0 0
    %233 = vmatprep.subr.bf16.mxu0 0
    %234 = vmatpush1.bf16.msra.mxu0 0
    %235 = vmatprep.subr.bf16.mxu0 0
    %236 = vmatpush1.bf16.msra.mxu0 0
    %237 = vmatprep.subr.bf16.mxu0 0
    %238 = vmatpush1.bf16.msra.mxu0 0
    %239 = vmatprep.subr.bf16.mxu0 0
    %240 = vmatpush1.bf16.msra.mxu0 0
    %241 = vmatprep.subr.bf16.mxu0 0
    %242 = vmatpush1.bf16.msra.mxu0 0
    %243 = vmatprep.mubr.bf16.mxu0 0
    %244 = vmatmul.mubr.bf16.gmra.mrb[0].mxu0 %v209
    %v245 = vpop.f32.mrb[0].mxu0
    %v246 = vadd.f32 %v199, %v245
    %v247 = vpop.f32.mrb[0].mxu0
    %v248 = vpop.f32.mrb[0].mxu0
    %v249 = vadd.f32 %v199, %v248
    %v250 = vpop.f32.mrb[0].mxu0
    %251 = vdwg.mxu0
    %v252 = vmax.f32 %v246, 0.0
    %v253 = vmax.f32 %v249, 0.0
    %v254 = vpack.c.bf16 %v253, %v252
    %v255 = vld [vmem:[%s7] sm:$0xf]
    %v256 = vld [vmem:[%s7 + $0x4] sm:$0xf]
    %v257 = vld [vmem:[%s8] sm:$0x1]
    %v259 = vlaneseq
    %v260 = vshrl.u32 %v259, 7
    %v261 = vsub.s32 0, %v260
    %v262 = vrot.slane %v257, %v261
    %v266 = vunpack.c.l.b16 %v255
    %v267 = vunpack.c.l.b16 %v256
    %v268 = vpack.c.b16 %v267, %v266
    %v271 = vsel %vm207, %v254, 0
    %273 = vmatprep.subr.bf16.mxu0 0
    %274 = vmatpush1.bf16.msra.mxu0 %v268
    %275 = vmatprep.subr.bf16.mxu0 0
    %276 = vmatpush1.bf16.msra.mxu0 0
    %277 = vmatprep.subr.bf16.mxu0 0
    %278 = vmatpush1.bf16.msra.mxu0 0
    %279 = vmatprep.subr.bf16.mxu0 0
    %280 = vmatpush1.bf16.msra.mxu0 0
    %281 = vmatprep.subr.bf16.mxu0 0
    %282 = vmatpush1.bf16.msra.mxu0 0
    %283 = vmatprep.subr.bf16.mxu0 0
    %284 = vmatpush1.bf16.msra.mxu0 0
    %285 = vmatprep.subr.bf16.mxu0 0
    %286 = vmatpush1.bf16.msra.mxu0 0
    %287 = vmatprep.subr.bf16.mxu0 0
    %288 = vmatpush1.bf16.msra.mxu0 0
    %289 = vmatprep.subr.bf16.mxu0 0
    %290 = vmatpush1.bf16.msra.mxu0 0
    %291 = vmatprep.subr.bf16.mxu0 0
    %292 = vmatpush1.bf16.msra.mxu0 0
    %293 = vmatprep.subr.bf16.mxu0 0
    %294 = vmatpush1.bf16.msra.mxu0 0
    %295 = vmatprep.subr.bf16.mxu0 0
    %296 = vmatpush1.bf16.msra.mxu0 0
    %297 = vmatprep.subr.bf16.mxu0 0
    %298 = vmatpush1.bf16.msra.mxu0 0
    %299 = vmatprep.subr.bf16.mxu0 0
    %300 = vmatpush1.bf16.msra.mxu0 0
    %301 = vmatprep.subr.bf16.mxu0 0
    %302 = vmatpush1.bf16.msra.mxu0 0
    %303 = vmatprep.subr.bf16.mxu0 0
    %304 = vmatpush1.bf16.msra.mxu0 0
    %305 = vmatprep.mubr.bf16.mxu0 0
    %306 = vmatmul.mubr.bf16.gmra.mrb[0].mxu0 %v271
    %v307 = vpop.f32.mrb[0].mxu0
    %v308 = vadd.f32 %v262, %v307
    %v309 = vpop.f32.mrb[0].mxu0
    %v310 = vpop.f32.mrb[0].mxu0
    %v311 = vadd.f32 %v262, %v310
    %v312 = vpop.f32.mrb[0].mxu0
    %313 = vdwg.mxu0
    %v314 = vlaneseq
    %v315 = vand.u32 %v314, 127
    %vm316 = vcmp.lt.s32.totalorder %v315, 6
    %v317 = vsel %vm316, %v308, -inf
    %v318 = vsel %vm316, %v311, -inf
    %vm319 = vcmask 97280
    %v320 = vsel %vm319, %v317, -inf
    %321 = vmax.xlane.f32.xlu0 %v320
    %v322 = vpop.xlane.xlu0 %321
    %v323 = vsel %vm319, %v318, -inf
    %324 = vmax.xlane.f32.xlu0 %v323
    %v325 = vpop.xlane.xlu0 %324
    %v326 = vsel %vm316, -inf, %v308
    %v327 = vsel %vm316, -inf, %v311
    %v328 = vsel %vm319, %v326, -inf
    %329 = vmax.xlane.f32.xlu0 %v328
    %v330 = vpop.xlane.xlu0 %329
    %v331 = vsel %vm319, %v327, -inf
    %332 = vmax.xlane.f32.xlu0 %v331
    %v333 = vpop.xlane.xlu0 %332
    %v334 = vsel %vm316, %v322, %v330
    %v335 = vsel %vm316, %v325, %v333
    %v336 = vsub.f32 %v308, %v334
    %v337 = vsub.f32 %v311, %v335
    %v338 = vmul.f32 %v336, 1.442695
    %v339 = vpow.pop %v338
    %v340 = vmul.f32 %v337, 1.442695
    %v341 = vpow.pop %v340
    %v342 = vsel %vm316, %v339, 0.0
    %v343 = vsel %vm316, %v341, 0.0
    %v344 = vsel %vm319, %v342, 0.0
    %345 = vadd.xlane.f32.xlu0 %v344
    %v346 = vpop.xlane.xlu0 %345
    %v347 = vsel %vm319, %v343, 0.0
    %348 = vadd.xlane.f32.xlu0 %v347
    %v349 = vpop.xlane.xlu0 %348
    %v350 = vsel %vm316, 0.0, %v339
    %v351 = vsel %vm316, 0.0, %v341
    %v352 = vsel %vm319, %v350, 0.0
    %353 = vadd.xlane.f32.xlu0 %v352
    %v354 = vpop.xlane.xlu0 %353
    %v355 = vsel %vm319, %v351, 0.0
    %356 = vadd.xlane.f32.xlu0 %v355
    %v357 = vpop.xlane.xlu0 %356
    %v358 = vsel %vm316, %v346, %v354
    %v359 = vsel %vm316, %v349, %v357
    %v360 = vrcp.pop %v358
    %v361 = vmul.f32 %v339, %v360
    %v362 = vrcp.pop %v359
    %v363 = vmul.f32 %v341, %v362
    %364 = vst.msk [vmem:[#allocation5] sm:$0xff] %vm319, %v361
    %365 = vst.msk [vmem:[#allocation5 + $0x8] sm:$0xff] %vm319, %v363
    // Predicated region
    $region42: #{tpu_custom_call.1} parent=1 // pred_check
      _
    $region43: #{tpu_custom_call.1} parent=1 // pred_check_branch
      %367 = sbr.rel (0) target = $region45
    $region44: #{tpu_custom_call.1} parent=1 // pred_region
      %s369 = ssub.s32 256, 256
      %370 = vsyncadd [#allocation4], %s369
      %s371 = sshll.u32 [#allocation5], 4
      %s372 = int_to_ptr.vmem [resolvable:$true] %s371
      %377 = dma.vmem_to_hbm [thread:$0]  %s372, 256, %s9, [#allocation4], 128, 128, 8
    $region45: #{tpu_custom_call.1} parent=1 // pred_fallthru
      _
    // Predicated region
    $region46: #{tpu_custom_call.1} parent=1 // pred_check
      _
    $region47: #{tpu_custom_call.1} parent=1 // pred_check_branch
      %379 = sbr.rel (0) target = $region49
    $region48: #{tpu_custom_call.1} parent=1 // pred_region
      %380 = dma.done [#allocation4], 256
    $region49: #{tpu_custom_call.1} parent=1 // pred_fallthru
      _
    %381 = vsyncpa [#allocation3], 1
    %382 = vsyncpa [#allocation4], 1

</llo_original>
